<compile_context>
chip_gen: v7x
topology: tpu7x:2x2x1
jax: 0.10.0
libtpu: 0.0.40
codegen_flags: <defaults>
</compile_context>

<pallas_src>
import functools
import math

import jax
import jax.numpy as jnp
from jax.experimental import pallas as pl
from jax.experimental.pallas import tpu as pltpu

# ----------------------------- model config ---------------------------------
HIDDEN = 768          # fixed by the nn.Linear(768, 10) in the module
NUM_HEADS = 12
HEAD_DIM = HIDDEN // NUM_HEADS
NUM_LAYERS = 2        # small synthetic BERT (real config would be 12)
INTERMEDIATE = 512    # small synthetic FFN width
VOCAB = 128
TYPE_VOCAB = 2
MAX_POS = 64          # "max_length" -> max_position_embeddings
NUM_CLASSES = 10
CLS_PAD = 128         # lane-dense padded classifier width
LN_EPS = 1e-12
DROPOUT_P = 0.5       # F.dropout default (training=True)


# ----------------------------- in-kernel helpers ------------------------------
def _layer_norm(h, g, b):
    """LayerNorm over the last axis (f32 math)."""
    mu = jnp.mean(h, axis=-1, keepdims=True)
    d = h - mu
    var = jnp.mean(d * d, axis=-1, keepdims=True)
    return d * jax.lax.rsqrt(var + LN_EPS) * g + b


def _gelu_tanh(y):
    # TODO(synk): HF BERT uses erf-GELU; tanh approximation used here for the TPU EUP.
    c = math.sqrt(2.0 / math.pi)
    return 0.5 * y * (1.0 + jnp.tanh(c * (y + 0.044715 * y * y * y)))


# ----------------------------- Pallas kernels --------------------------------
def _ln_kernel(x_ref, g_ref, b_ref, o_ref):
    """Plain LayerNorm (used once for the embedding output)."""
    o_ref[...] = _layer_norm(x_ref[...], g_ref[...], b_ref[...])


def layernorm(x, gamma, beta):
    M, H = x.shape
    return pl.pallas_call(
        _ln_kernel,
        out_shape=jax.ShapeDtypeStruct((M, H), jnp.float32),
        in_specs=[pl.BlockSpec(memory_space=pltpu.MemorySpace.VMEM)] * 3,
        out_specs=pl.BlockSpec(memory_space=pltpu.MemorySpace.VMEM),
    )(x, gamma, beta)


def _encoder_layer_kernel(x_ref, mask_ref,
                          wqkv_ref, bqkv_ref, wo_ref, bo_ref,
                          ln1g_ref, ln1b_ref,
                          w1_ref, b1_ref, w2_ref, b2_ref,
                          ln2g_ref, ln2b_ref,
                          o_ref):
    """One full BERT encoder layer for a single batch element.

    x: (S, H) f32 activations; weights: bf16 MXU operands; LN/softmax in f32.
    """
    x = x_ref[0]                     # (S, H) f32
    mask = mask_ref[0]               # (1, S) additive attention mask

    # --- fused QKV projection: (S, H) @ (H, 3H) ---
    qkv = jnp.dot(x.astype(jnp.bfloat16), wqkv_ref[...],
                  preferred_element_type=jnp.float32) + bqkv_ref[...]   # (S, 3H)

    # --- multi-head self-attention, all heads in this grid step ---
    scale = 1.0 / math.sqrt(HEAD_DIM)
    ctx_heads = []
    for h in range(NUM_HEADS):
        q = qkv[:, h * HEAD_DIM:(h + 1) * HEAD_DIM]
        k = qkv[:, HIDDEN + h * HEAD_DIM: HIDDEN + (h + 1) * HEAD_DIM]
        v = qkv[:, 2 * HIDDEN + h * HEAD_DIM: 2 * HIDDEN + (h + 1) * HEAD_DIM]
        # scores = q @ k^T without an explicit transpose
        s = jax.lax.dot_general(
            q.astype(jnp.bfloat16), k.astype(jnp.bfloat16),
            (((1,), (1,)), ((), ())),
            preferred_element_type=jnp.float32) * scale                  # (S, S)
        s = s + mask
        s = s - jnp.max(s, axis=-1, keepdims=True)
        p = jnp.exp(s)
        p = p * pl.reciprocal(jnp.sum(p, axis=-1, keepdims=True), approx=True)
        ctx_heads.append(
            jnp.dot(p.astype(jnp.bfloat16), v.astype(jnp.bfloat16),
                    preferred_element_type=jnp.float32))                 # (S, dH)
    ctx = jnp.concatenate(ctx_heads, axis=-1)                            # (S, H)

    # --- attention output projection + residual LayerNorm ---
    attn_out = jnp.dot(ctx.astype(jnp.bfloat16), wo_ref[...],
                       preferred_element_type=jnp.float32) + bo_ref[...]
    h1 = _layer_norm(attn_out + x, ln1g_ref[...], ln1b_ref[...])

    # --- FFN (GELU) + residual LayerNorm ---
    ff = jnp.dot(h1.astype(jnp.bfloat16), w1_ref[...],
                 preferred_element_type=jnp.float32) + b1_ref[...]
    ff = _gelu_tanh(ff)
    ff2 = jnp.dot(ff.astype(jnp.bfloat16), w2_ref[...],
                  preferred_element_type=jnp.float32) + b2_ref[...]
    o_ref[0] = _layer_norm(ff2 + h1, ln2g_ref[...], ln2b_ref[...])


def encoder_layer(x, add_mask, lp):
    """x: (B, S, H) f32; add_mask: (B, 1, S) additive mask; lp: layer params."""
    B, S, H = x.shape
    w_spec = lambda shape: pl.BlockSpec(shape, lambda b: (0, 0))
    return pl.pallas_call(
        _encoder_layer_kernel,
        out_shape=jax.ShapeDtypeStruct((B, S, H), jnp.float32),
        grid=(B,),
        in_specs=[
            pl.BlockSpec((1, S, H), lambda b: (b, 0, 0)),     # x
            pl.BlockSpec((1, 1, S), lambda b: (b, 0, 0)),     # additive mask
            w_spec((H, 3 * H)),                               # wqkv (bf16)
            w_spec((1, 3 * H)),                               # bqkv
            w_spec((H, H)),                                   # wo (bf16)
            w_spec((1, H)),                                   # bo
            w_spec((1, H)),                                   # ln1_g
            w_spec((1, H)),                                   # ln1_b
            w_spec((H, INTERMEDIATE)),                        # w1 (bf16)
            w_spec((1, INTERMEDIATE)),                        # b1
            w_spec((INTERMEDIATE, H)),                        # w2 (bf16)
            w_spec((1, H)),                                   # b2
            w_spec((1, H)),                                   # ln2_g
            w_spec((1, H)),                                   # ln2_b
        ],
        out_specs=pl.BlockSpec((1, S, H), lambda b: (b, 0, 0)),
        compiler_params=pltpu.CompilerParams(
            dimension_semantics=("parallel",)),               # 2-way split on v7x
    )(x, add_mask,
      lp["wqkv"], lp["bqkv"], lp["wo"], lp["bo"],
      lp["ln1_g"], lp["ln1_b"],
      lp["w1"], lp["b1"], lp["w2"], lp["b2"],
      lp["ln2_g"], lp["ln2_b"])


def _head_kernel(seed_ref, cls_ref, pw_ref, pb_ref, cw_ref, cb_ref, o_ref, *, p):
    """Fused pooler (tanh) -> classifier (lane-dense padded) -> training dropout."""
    pooled = jnp.tanh(
        jnp.dot(cls_ref[...].astype(jnp.bfloat16), pw_ref[...],
                preferred_element_type=jnp.float32) + pb_ref[...])        # (B, H)
    logits = (jnp.dot(pooled.astype(jnp.bfloat16), cw_ref[...],
                      preferred_element_type=jnp.float32) + cb_ref[...])  # (B, 128)

    # In-kernel counter-based hash PRNG (works on TPU and in interpret mode;
    # pltpu.prng_seed has no CPU lowering).
    # TODO(synk): PyTorch's dropout RNG stream is not reproduced; statistically equivalent.
    B, N = logits.shape
    seed = seed_ref[0].astype(jnp.uint32)
    row = jax.lax.broadcasted_iota(jnp.int32, (B, N), 0).astype(jnp.uint32)
    col = jax.lax.broadcasted_iota(jnp.int32, (B, N), 1).astype(jnp.uint32)
    h = row * jnp.uint32(N) + col + seed * jnp.uint32(0x9E3779B9)
    h = (h ^ (h >> 16)) * jnp.uint32(0x7FEB352D)
    h = (h ^ (h >> 15)) * jnp.uint32(0x846CA68B)
    h = h ^ (h >> 16)
    u = (h >> 8).astype(jnp.float32) * (1.0 / float(1 << 24))             # uniform [0,1)
    keep = (u >= p).astype(jnp.float32)                                   # P(keep)=1-p
    o_ref[...] = logits * keep * (1.0 / (1.0 - p))


def head_classifier(cls_tok, pool_w, pool_b, cls_w_pad, cls_b_pad, seed, p=DROPOUT_P):
    B = cls_tok.shape[0]
    kernel = functools.partial(_head_kernel, p=p)
    out_pad = pl.pallas_call(
        kernel,
        out_shape=jax.ShapeDtypeStruct((B, CLS_PAD), jnp.float32),
        in_specs=[
            pl.BlockSpec(memory_space=pltpu.MemorySpace.SMEM),   # seed (1,)
            pl.BlockSpec(memory_space=pltpu.MemorySpace.VMEM),   # cls tokens
            pl.BlockSpec(memory_space=pltpu.MemorySpace.VMEM),   # pool_w (bf16)
            pl.BlockSpec(memory_space=pltpu.MemorySpace.VMEM),   # pool_b
            pl.BlockSpec(memory_space=pltpu.MemorySpace.VMEM),   # cls_w_pad (bf16)
            pl.BlockSpec(memory_space=pltpu.MemorySpace.VMEM),   # cls_b_pad
        ],
        out_specs=pl.BlockSpec(memory_space=pltpu.MemorySpace.VMEM),
    )(seed, cls_tok, pool_w, pool_b, cls_w_pad, cls_b_pad)
    return out_pad[:, :NUM_CLASSES]


# ----------------------------- parameters ------------------------------------
def init_params(key):
    # TODO(synk): real HF pretrained BERT weights are replaced by synthetic
    # deterministically-initialized parameters of the same structure.
    def nrm(k, shape, scale=0.02):
        return scale * jax.random.normal(k, shape, dtype=jnp.float32)

    keys = jax.random.split(key, 8 + NUM_LAYERS)
    p = {
        "word_emb": nrm(keys[0], (VOCAB, HIDDEN)),
        "pos_emb": nrm(keys[1], (MAX_POS, HIDDEN)),
        "type_emb": nrm(keys[2], (TYPE_VOCAB, HIDDEN)),
        "emb_ln_g": jnp.ones((1, HIDDEN), jnp.float32),
        "emb_ln_b": jnp.zeros((1, HIDDEN), jnp.float32),
        "pool_w": nrm(keys[3], (HIDDEN, HIDDEN)).astype(jnp.bfloat16),
        "pool_b": jnp.zeros((1, HIDDEN), jnp.float32),
    }
    cls_w = nrm(keys[4], (HIDDEN, NUM_CLASSES))
    cls_w_pad = jnp.zeros((HIDDEN, CLS_PAD), jnp.float32).at[:, :NUM_CLASSES].set(cls_w)
    p["cls_w_pad"] = cls_w_pad.astype(jnp.bfloat16)
    p["cls_b_pad"] = jnp.zeros((1, CLS_PAD), jnp.float32)

    p["layers"] = []
    for li in range(NUM_LAYERS):
        lk = jax.random.split(keys[8 + li], 6)
        wq = nrm(lk[0], (HIDDEN, HIDDEN))
        wk = nrm(lk[1], (HIDDEN, HIDDEN))
        wv = nrm(lk[2], (HIDDEN, HIDDEN))
        p["layers"].append({
            "wqkv": jnp.concatenate([wq, wk, wv], axis=1).astype(jnp.bfloat16),
            "bqkv": jnp.zeros((1, 3 * HIDDEN), jnp.float32),
            "wo": nrm(lk[3], (HIDDEN, HIDDEN)).astype(jnp.bfloat16),
            "bo": jnp.zeros((1, HIDDEN), jnp.float32),
            "ln1_g": jnp.ones((1, HIDDEN), jnp.float32),
            "ln1_b": jnp.zeros((1, HIDDEN), jnp.float32),
            "w1": nrm(lk[4], (HIDDEN, INTERMEDIATE)).astype(jnp.bfloat16),
            "b1": jnp.zeros((1, INTERMEDIATE), jnp.float32),
            "w2": nrm(lk[5], (INTERMEDIATE, HIDDEN)).astype(jnp.bfloat16),
            "b2": jnp.zeros((1, HIDDEN), jnp.float32),
            "ln2_g": jnp.ones((1, HIDDEN), jnp.float32),
            "ln2_b": jnp.zeros((1, HIDDEN), jnp.float32),
        })
    return p


# ----------------------------- forward pass -----------------------------------
def my_model_forward(params, input_ids, attention_mask, token_type_ids, dropout_seed):
    B, S = input_ids.shape

    # --- embeddings (gather is plain-JAX glue) + LayerNorm ---
    emb = (params["word_emb"][input_ids]
           + params["pos_emb"][:S][None, :, :]
           + params["type_emb"][token_type_ids])                    # (B, S, H)
    x = layernorm(emb.reshape(B * S, HIDDEN),
                  params["emb_ln_g"], params["emb_ln_b"]).reshape(B, S, HIDDEN)

    # additive attention mask (0 keep, -1e4 masked), shape (B, 1, S)
    add_mask = ((1.0 - attention_mask.astype(jnp.float32)) * -10000.0).reshape(B, 1, S)

    # --- transformer encoder: one fused pallas_call per layer ---
    for lp in params["layers"]:
        x = encoder_layer(x, add_mask, lp)

    # --- pooler + classifier + training-mode dropout (fused, lane-dense) ---
    cls_tok = x[:, 0, :]                                            # (B, H)
    return head_classifier(cls_tok, params["pool_w"], params["pool_b"],
                           params["cls_w_pad"], params["cls_b_pad"],
                           dropout_seed, p=DROPOUT_P)


# ----------------------------- main -------------------------------------------
if __name__ == "__main__":
    key = jax.random.PRNGKey(0)
    pkey, ikey = jax.random.split(key)

    params = init_params(pkey)

    B, S = 2, 8
    input_ids = jax.random.randint(ikey, (B, S), 0, VOCAB, dtype=jnp.int32)
    attention_mask = jnp.ones((B, S), dtype=jnp.int32)
    token_type_ids = jnp.zeros((B, S), dtype=jnp.int32)
    dropout_seed = jnp.array([0], dtype=jnp.int32)

    out = my_model_forward(params, input_ids, attention_mask, token_type_ids, dropout_seed)
    out = jax.block_until_ready(out)
    assert out.shape == (B, NUM_CLASSES) and out.dtype == jnp.float32
    print("KERNEL_OK")
</pallas_src>

<mosaic_0001>
module attributes {stable_mosaic.version = 11 : i64} {
  func.func @_ln_kernel(%arg0: memref<16x768xf32, #tpu.memory_space<vmem>>, %arg1: memref<1x768xf32, #tpu.memory_space<vmem>>, %arg2: memref<1x768xf32, #tpu.memory_space<vmem>>, %arg3: memref<16x768xf32, #tpu.memory_space<vmem>>) attributes {dimension_semantics = [], scalar_prefetch = 0 : i64, scratch_operands = 0 : i64, tpu.core_type = #tpu.core_type<tc>} {
    %c0 = arith.constant 0 : index
    %c0_0 = arith.constant 0 : index
    %0 = vector.load %arg0[%c0, %c0_0] : memref<16x768xf32, #tpu.memory_space<vmem>>, vector<16x768xf32>
    %c0_1 = arith.constant 0 : index
    %c0_2 = arith.constant 0 : index
    %1 = vector.load %arg1[%c0_1, %c0_2] : memref<1x768xf32, #tpu.memory_space<vmem>>, vector<1x768xf32>
    %c0_3 = arith.constant 0 : index
    %c0_4 = arith.constant 0 : index
    %2 = vector.load %arg2[%c0_3, %c0_4] : memref<1x768xf32, #tpu.memory_space<vmem>>, vector<1x768xf32>
    %cst = arith.constant dense<0.000000e+00> : vector<16xf32>
    %3 = vector.multi_reduction <add>, %0, %cst [1] : vector<16x768xf32> to vector<16xf32>
    %4 = vector.shape_cast %3 : vector<16xf32> to vector<16x1xf32>
    %cst_5 = arith.constant 7.680000e+02 : f32
    %5 = vector.broadcast %cst_5 : f32 to vector<16x1xf32>
    %6 = arith.divf %4, %5 : vector<16x1xf32>
    %7 = vector.broadcast %6 : vector<16x1xf32> to vector<16x768xf32>
    %8 = arith.subf %0, %7 : vector<16x768xf32>
    %9 = arith.mulf %8, %8 : vector<16x768xf32>
    %cst_6 = arith.constant dense<0.000000e+00> : vector<16xf32>
    %10 = vector.multi_reduction <add>, %9, %cst_6 [1] : vector<16x768xf32> to vector<16xf32>
    %11 = vector.shape_cast %10 : vector<16xf32> to vector<16x1xf32>
    %cst_7 = arith.constant 7.680000e+02 : f32
    %12 = vector.broadcast %cst_7 : f32 to vector<16x1xf32>
    %13 = arith.divf %11, %12 : vector<16x1xf32>
    %cst_8 = arith.constant 9.99999996E-13 : f32
    %14 = vector.broadcast %cst_8 : f32 to vector<16x1xf32>
    %15 = arith.addf %13, %14 : vector<16x1xf32>
    %16 = math.rsqrt %15 : vector<16x1xf32>
    %17 = vector.broadcast %16 : vector<16x1xf32> to vector<16x768xf32>
    %18 = arith.mulf %8, %17 : vector<16x768xf32>
    %19 = vector.broadcast %1 : vector<1x768xf32> to vector<16x768xf32>
    %20 = arith.mulf %18, %19 : vector<16x768xf32>
    %21 = vector.broadcast %2 : vector<1x768xf32> to vector<16x768xf32>
    %22 = arith.addf %20, %21 : vector<16x768xf32>
    %c0_9 = arith.constant 0 : index
    %c0_10 = arith.constant 0 : index
    %23 = vector.load %arg3[%c0_9, %c0_10] : memref<16x768xf32, #tpu.memory_space<vmem>>, vector<16x768xf32>
    tpu.vector_store %arg3[%c0_9, %c0_10], %22 {strides = array<i32>} : memref<16x768xf32, #tpu.memory_space<vmem>>, vector<16x768xf32>,
    return
  }
}

</mosaic_0001>

<llo_original>
// kernel: tpu_custom_call.1
$region0: #{tpu_custom_call.1}
  #allocation0 [shape = 'u32[]', space=smem, size = 0x4, offset = 0x4, fixed_abs, tag = 'smem constant byte address 0x4 - core index']
  #allocation1 [shape = 'u32[144,128]{1,0:T(1,128)}', space=vmem, size = 0x12000, scoped, tag = 'internal scratch']
  %s0 = inlined_call_operand.hbm [shape: f32[16,768], index: 0, kind: input, shape index: {}]
  %s1 = inlined_call_operand.hbm [shape: f32[1,768], index: 1, kind: input, shape index: {}]
  %s2 = inlined_call_operand.vmem [shape: f32[1,768], index: 2, kind: input, shape index: {}]
  %s3 = inlined_call_operand.hbm [shape: f32[16,768], index: 3, kind: output, shape index: {}]
  %s4 = sld [smem:[#allocation0]]
  $region30: #{tpu_custom_call.1} parent=0
    _
  %s6 = ssub.s32 1, %s4
  %s7 = scalar_select 0, %s6, %s4
  $region1: #{tpu_custom_call.1} parent=0
    #allocation2 [shape = 'u8[49152]{0}', space=vmem, size = 0xc000, scoped, tag = 'input window, operand 0, single buffered']
    #allocation3 [shape = 's32[1]{0}', space=sflag, size = 0x4, scoped, tag = 'scoped memory for tpu_custom_call.1']
    #allocation4 [shape = 's32[1]{0}', space=sflag, size = 0x4, scoped, tag = 'scoped memory for tpu_custom_call.1']
    #allocation5 [shape = 'u8[3072]{0}', space=vmem, size = 0xc00, scoped, tag = 'input window, operand 1, single buffered']
    #allocation6 [shape = 's32[1]{0}', space=sflag, size = 0x4, scoped, tag = 'scoped memory for tpu_custom_call.1']
    #allocation7 [shape = 'u8[49152]{0}', space=vmem, size = 0xc000, scoped, tag = 'output window, operand 0, single buffered']
    %8 = vsyncpa [#allocation3], 0
    %9 = vsyncpa [#allocation6], 0
    %10 = vsyncpa [#allocation4], 0
    // Predicated region
    $region2: #{tpu_custom_call.1} parent=1 // pred_check
      _
    $region3: #{tpu_custom_call.1} parent=1 // pred_check_branch
      %12 = sbr.rel (0) target = $region5
    $region4: #{tpu_custom_call.1} parent=1 // pred_region
      %s14 = ssub.s32 1536, 1536
      %15 = vsyncadd [#allocation3], %s14
      %s16 = sshll.u32 [#allocation2], 4
      %s17 = int_to_ptr.vmem [resolvable:$true] %s16
      %22 = dma.hbm_to_vmem [thread:$0]  %s0, 1536, %s17, [#allocation3], 768, 768, 48
    $region5: #{tpu_custom_call.1} parent=1 // pred_fallthru
      _
    // Predicated region
    $region6: #{tpu_custom_call.1} parent=1 // pred_check
      _
    $region7: #{tpu_custom_call.1} parent=1 // pred_check_branch
      %24 = sbr.rel (0) target = $region9
    $region8: #{tpu_custom_call.1} parent=1 // pred_region
      %s26 = ssub.s32 96, 96
      %27 = vsyncadd [#allocation6], %s26
      %s29 = sshll.u32 [#allocation5], 4
      %s30 = int_to_ptr.vmem [resolvable:$true] %s29
      %32 = dma.hbm_to_vmem [thread:$0]  %s1, 96, %s30, [#allocation6]
    $region9: #{tpu_custom_call.1} parent=1 // pred_fallthru
      _
    // Predicated region
    $region10: #{tpu_custom_call.1} parent=1 // pred_check
      _
    $region11: #{tpu_custom_call.1} parent=1 // pred_check_branch
      %34 = sbr.rel (0) target = $region13
    $region12: #{tpu_custom_call.1} parent=1 // pred_region
      _
    $region13: #{tpu_custom_call.1} parent=1 // pred_fallthru
      _
    // Predicated region
    $region14: #{tpu_custom_call.1} parent=1 // pred_check
      _
    $region15: #{tpu_custom_call.1} parent=1 // pred_check_branch
      %36 = sbr.rel (0) target = $region17
    $region16: #{tpu_custom_call.1} parent=1 // pred_region
      %37 = dma.done [#allocation3], 1536
    $region17: #{tpu_custom_call.1} parent=1 // pred_fallthru
      _
    // Predicated region
    $region18: #{tpu_custom_call.1} parent=1 // pred_check
      _
    $region19: #{tpu_custom_call.1} parent=1 // pred_check_branch
      %39 = sbr.rel (0) target = $region21
    $region20: #{tpu_custom_call.1} parent=1 // pred_region
      %40 = dma.done [#allocation6], 96
    $region21: #{tpu_custom_call.1} parent=1 // pred_fallthru
      _
    %v41 = vld [vmem:[#allocation2] sm:$0xff]
    %v42 = vld [vmem:[#allocation2 + $0x8] sm:$0xff]
    %v43 = vld [vmem:[#allocation2 + $0x10] sm:$0xff]
    %v44 = vld [vmem:[#allocation2 + $0x18] sm:$0xff]
    %v45 = vld [vmem:[#allocation2 + $0x20] sm:$0xff]
    %v46 = vld [vmem:[#allocation2 + $0x28] sm:$0xff]
    %v47 = vld [vmem:[#allocation2 + $0x30] sm:$0xff]
    %v48 = vld [vmem:[#allocation2 + $0x38] sm:$0xff]
    %v49 = vld [vmem:[#allocation2 + $0x40] sm:$0xff]
    %v50 = vld [vmem:[#allocation2 + $0x48] sm:$0xff]
    %v51 = vld [vmem:[#allocation2 + $0x50] sm:$0xff]
    %v52 = vld [vmem:[#allocation2 + $0x58] sm:$0xff]
    %v53 = vld [vmem:[#allocation5] sm:$0x3f]
    %v54 = vld [vmem:[%s2] sm:$0x3f]
    %v55 = vadd.f32 %v41, %v42
    %v56 = vadd.f32 %v55, %v43
    %v57 = vadd.f32 %v56, %v44
    %v58 = vadd.f32 %v57, %v45
    %v59 = vadd.f32 %v58, %v46
    %60 = vadd.xlane.f32.xlu0 %v59
    %v61 = vpop.xlane.xlu0 %60
    %v62 = vadd.f32 %v47, %v48
    %v63 = vadd.f32 %v62, %v49
    %v64 = vadd.f32 %v63, %v50
    %v65 = vadd.f32 %v64, %v51
    %v66 = vadd.f32 %v65, %v52
    %67 = vadd.xlane.f32.xlu0 %v66
    %v68 = vpop.xlane.xlu0 %67
    %v69 = vrcp.pop 768.0
    %v70 = vmul.f32 %v61, %v69
    %v71 = vmul.f32 %v68, %v69
    %v72 = vsub.f32 %v41, %v70
    %v73 = vsub.f32 %v42, %v70
    %v74 = vsub.f32 %v43, %v70
    %v75 = vsub.f32 %v44, %v70
    %v76 = vsub.f32 %v45, %v70
    %v77 = vsub.f32 %v46, %v70
    %v78 = vsub.f32 %v47, %v71
    %v79 = vsub.f32 %v48, %v71
    %v80 = vsub.f32 %v49, %v71
    %v81 = vsub.f32 %v50, %v71
    %v82 = vsub.f32 %v51, %v71
    %v83 = vsub.f32 %v52, %v71
    %v84 = vmul.f32 %v72, %v72
    %v85 = vmul.f32 %v73, %v73
    %v86 = vmul.f32 %v74, %v74
    %v87 = vmul.f32 %v75, %v75
    %v88 = vmul.f32 %v76, %v76
    %v89 = vmul.f32 %v77, %v77
    %v90 = vmul.f32 %v78, %v78
    %v91 = vmul.f32 %v79, %v79
    %v92 = vmul.f32 %v80, %v80
    %v93 = vmul.f32 %v81, %v81
    %v94 = vmul.f32 %v82, %v82
    %v95 = vmul.f32 %v83, %v83
    %v96 = vadd.f32 %v84, %v85
    %v97 = vadd.f32 %v96, %v86
    %v98 = vadd.f32 %v97, %v87
    %v99 = vadd.f32 %v98, %v88
    %v100 = vadd.f32 %v99, %v89
    %101 = vadd.xlane.f32.xlu0 %v100
    %v102 = vpop.xlane.xlu0 %101
    %v103 = vadd.f32 %v90, %v91
    %v104 = vadd.f32 %v103, %v92
    %v105 = vadd.f32 %v104, %v93
    %v106 = vadd.f32 %v105, %v94
    %v107 = vadd.f32 %v106, %v95
    %108 = vadd.xlane.f32.xlu0 %v107
    %v109 = vpop.xlane.xlu0 %108
    %v110 = vmul.f32 %v102, %v69
    %v111 = vmul.f32 %v109, %v69
    %v112 = vadd.f32 %v110, 1e-12
    %v113 = vadd.f32 %v111, 1e-12
    %v114 = vrsqrt.pop %v112
    %v115 = vrsqrt.pop %v113
    %v116 = vmul.f32 %v72, %v114
    %v117 = vmul.f32 %v73, %v114
    %v118 = vmul.f32 %v74, %v114
    %v119 = vmul.f32 %v75, %v114
    %v120 = vmul.f32 %v76, %v114
    %v121 = vmul.f32 %v77, %v114
    %v122 = vmul.f32 %v78, %v115
    %v123 = vmul.f32 %v79, %v115
    %v124 = vmul.f32 %v80, %v115
    %v125 = vmul.f32 %v81, %v115
    %v126 = vmul.f32 %v82, %v115
    %v127 = vmul.f32 %v83, %v115
    %v129 = vlaneseq
    %v130 = vshrl.u32 %v129, 7
    %v131 = vsub.s32 0, %v130
    %v132 = vrot.slane %v53, %v131
    %v133 = vlaneseq
    %v134 = vshrl.u32 %v133, 7
    %v135 = vsub.s32 1, %v134
    %v136 = vrot.slane %v53, %v135
    %v137 = vlaneseq
    %v138 = vshrl.u32 %v137, 7
    %v139 = vsub.s32 2, %v138
    %v140 = vrot.slane %v53, %v139
    %v141 = vlaneseq
    %v142 = vshrl.u32 %v141, 7
    %v143 = vsub.s32 3, %v142
    %v144 = vrot.slane %v53, %v143
    %v145 = vlaneseq
    %v146 = vshrl.u32 %v145, 7
    %v147 = vsub.s32 4, %v146
    %v148 = vrot.slane %v53, %v147
    %v149 = vlaneseq
    %v150 = vshrl.u32 %v149, 7
    %v151 = vsub.s32 5, %v150
    %v152 = vrot.slane %v53, %v151
    %v159 = vmul.f32 %v116, %v132
    %v160 = vmul.f32 %v117, %v136
    %v161 = vmul.f32 %v118, %v140
    %v162 = vmul.f32 %v119, %v144
    %v163 = vmul.f32 %v120, %v148
    %v164 = vmul.f32 %v121, %v152
    %v165 = vmul.f32 %v122, %v132
    %v166 = vmul.f32 %v123, %v136
    %v167 = vmul.f32 %v124, %v140
    %v168 = vmul.f32 %v125, %v144
    %v169 = vmul.f32 %v126, %v148
    %v170 = vmul.f32 %v127, %v152
    %v172 = vlaneseq
    %v173 = vshrl.u32 %v172, 7
    %v174 = vsub.s32 0, %v173
    %v175 = vrot.slane %v54, %v174
    %v176 = vlaneseq
    %v177 = vshrl.u32 %v176, 7
    %v178 = vsub.s32 1, %v177
    %v179 = vrot.slane %v54, %v178
    %v180 = vlaneseq
    %v181 = vshrl.u32 %v180, 7
    %v182 = vsub.s32 2, %v181
    %v183 = vrot.slane %v54, %v182
    %v184 = vlaneseq
    %v185 = vshrl.u32 %v184, 7
    %v186 = vsub.s32 3, %v185
    %v187 = vrot.slane %v54, %v186
    %v188 = vlaneseq
    %v189 = vshrl.u32 %v188, 7
    %v190 = vsub.s32 4, %v189
    %v191 = vrot.slane %v54, %v190
    %v192 = vlaneseq
    %v193 = vshrl.u32 %v192, 7
    %v194 = vsub.s32 5, %v193
    %v195 = vrot.slane %v54, %v194
    %v202 = vadd.f32 %v159, %v175
    %v203 = vadd.f32 %v160, %v179
    %v204 = vadd.f32 %v161, %v183
    %v205 = vadd.f32 %v162, %v187
    %v206 = vadd.f32 %v163, %v191
    %v207 = vadd.f32 %v164, %v195
    %v208 = vadd.f32 %v165, %v175
    %v209 = vadd.f32 %v166, %v179
    %v210 = vadd.f32 %v167, %v183
    %v211 = vadd.f32 %v168, %v187
    %v212 = vadd.f32 %v169, %v191
    %v213 = vadd.f32 %v170, %v195
    %214 = vst [vmem:[#allocation7] sm:$0xff] %v202
    %215 = vst [vmem:[#allocation7 + $0x8] sm:$0xff] %v203
    %216 = vst [vmem:[#allocation7 + $0x10] sm:$0xff] %v204
    %217 = vst [vmem:[#allocation7 + $0x18] sm:$0xff] %v205
    %218 = vst [vmem:[#allocation7 + $0x20] sm:$0xff] %v206
    %219 = vst [vmem:[#allocation7 + $0x28] sm:$0xff] %v207
    %220 = vst [vmem:[#allocation7 + $0x30] sm:$0xff] %v208
    %221 = vst [vmem:[#allocation7 + $0x38] sm:$0xff] %v209
    %222 = vst [vmem:[#allocation7 + $0x40] sm:$0xff] %v210
    %223 = vst [vmem:[#allocation7 + $0x48] sm:$0xff] %v211
    %224 = vst [vmem:[#allocation7 + $0x50] sm:$0xff] %v212
    %225 = vst [vmem:[#allocation7 + $0x58] sm:$0xff] %v213
    // Predicated region
    $region22: #{tpu_custom_call.1} parent=1 // pred_check
      _
    $region23: #{tpu_custom_call.1} parent=1 // pred_check_branch
      %227 = sbr.rel (0) target = $region25
    $region24: #{tpu_custom_call.1} parent=1 // pred_region
      %s229 = ssub.s32 1536, 1536
      %230 = vsyncadd [#allocation4], %s229
      %s231 = sshll.u32 [#allocation7], 4
      %s232 = int_to_ptr.vmem [resolvable:$true] %s231
      %237 = dma.vmem_to_hbm [thread:$0]  %s232, 1536, %s3, [#allocation4], 768, 768, 48
    $region25: #{tpu_custom_call.1} parent=1 // pred_fallthru
      _
    // Predicated region
    $region26: #{tpu_custom_call.1} parent=1 // pred_check
      _
    $region27: #{tpu_custom_call.1} parent=1 // pred_check_branch
      %239 = sbr.rel (0) target = $region29
    $region28: #{tpu_custom_call.1} parent=1 // pred_region
      %240 = dma.done [#allocation4], 1536
    $region29: #{tpu_custom_call.1} parent=1 // pred_fallthru
      _
    %241 = vsyncpa [#allocation3], 1
    %242 = vsyncpa [#allocation6], 1
    %243 = vsyncpa [#allocation4], 1

</llo_original>
